<compile_context>
chip_gen: v7x
topology: tpu7x:2x2x1
jax: 0.10.0
libtpu: 0.0.40
codegen_flags: <defaults>
</compile_context>

<pallas_src>
import functools

import jax
import jax.numpy as jnp
from jax.experimental import pallas as pl
from jax.experimental.pallas import tpu as pltpu


def _round_up(x, m):
    return ((x + m - 1) // m) * m


def _choose_h_tile(Hp, target=512):
    """Largest multiple-of-128 divisor of Hp that is <= target (Hp % 128 == 0)."""
    best = 128
    cand = 128
    while cand <= min(Hp, target):
        if Hp % cand == 0:
            best = cand
        cand += 128
    return best


def _ffn_kernel(x_ref, w1_ref, b1_ref, w2_ref, b2_ref, o_ref, acc_ref, *, act_fn):
    """One (tm, Ep) row tile; grid axis 1 reduces over H chunks into acc_ref."""
    k = pl.program_id(1)

    @pl.when(k == 0)
    def _init():
        acc_ref[...] = jnp.zeros_like(acc_ref)

    # fc1 chunk: (tm, Ep) @ (Ep, th) -> (tm, th); bf16 operands, f32 accumulate.
    h = jnp.dot(x_ref[...], w1_ref[...], preferred_element_type=jnp.float32)
    h = h + b1_ref[...]
    # Activation in f32 (v5e has no bf16 VPU/EUP path).
    # TODO(synk): PyTorch nn.GELU() default is exact erf; tanh-approx GELU used
    # here (difference ~1e-3); swap act for an exact-erf callable if required.
    h = act_fn(h)
    # TODO(synk): Dropout is identity in eval mode; training-mode dropout would
    # need pltpu.prng_seed / pltpu.prng_random_bits masking here.

    # fc2 partial: (tm, th) @ (th, Ep) accumulated into f32 scratch.
    acc_ref[...] += jnp.dot(h.astype(jnp.bfloat16), w2_ref[...],
                            preferred_element_type=jnp.float32)

    @pl.when(k == pl.num_programs(1) - 1)
    def _finalize():
        o_ref[...] = (acc_ref[...] + b2_ref[...]).astype(o_ref.dtype)


@functools.partial(jax.jit, static_argnames=("tm", "th", "act"))
def gran_ffn(x, w1, b1, w2, b2, *, tm=256, th=None, act=jax.nn.gelu):
    """x: [B, S, E] -> [B, S, E].  Weights are [in_features, out_features]."""
    B, S, E = x.shape
    H = w1.shape[1]
    M = B * S

    # Lane-dense padding: last dims -> multiples of 128; row tile -> multiple of 8.
    Ep = _round_up(E, 128)
    Hp = _round_up(H, 128)
    tm = min(tm, _round_up(M, 8))
    Mp = _round_up(M, tm)
    if th is None:
        th = _choose_h_tile(Hp)
    th = min(th, Hp)
    if Hp % th != 0 or th % 128 != 0:
        raise ValueError("th must be a multiple of 128 dividing padded H")

    # Pad + cast: bf16 matmul operands, f32 biases.
    x2 = jnp.pad(x.reshape(M, E), ((0, Mp - M), (0, Ep - E))).astype(jnp.bfloat16)
    w1p = jnp.pad(w1, ((0, Ep - E), (0, Hp - H))).astype(jnp.bfloat16)
    w2p = jnp.pad(w2, ((0, Hp - H), (0, Ep - E))).astype(jnp.bfloat16)
    b1p = jnp.pad(b1, (0, Hp - H)).reshape(1, Hp).astype(jnp.float32)
    b2p = jnp.pad(b2, (0, Ep - E)).reshape(1, Ep).astype(jnp.float32)

    grid = (Mp // tm, Hp // th)

    cost = pl.CostEstimate(
        flops=4 * M * E * H,          # two matmuls (2*M*E*H each)
        transcendentals=M * H,        # GELU
        bytes_accessed=(x2.size * 2 + Mp * Ep * x.dtype.itemsize
                        + w1p.size * 2 + w2p.size * 2
                        + b1p.size * 4 + b2p.size * 4),
    )

    out = pl.pallas_call(
        functools.partial(_ffn_kernel, act_fn=act),
        out_shape=jax.ShapeDtypeStruct((Mp, Ep), x.dtype),
        grid_spec=pltpu.PrefetchScalarGridSpec(
            num_scalar_prefetch=0,
            grid=grid,
            in_specs=[
                pl.BlockSpec((tm, Ep), lambda i, k: (i, 0)),   # x row tile
                pl.BlockSpec((Ep, th), lambda i, k: (0, k)),   # W1 H-chunk
                pl.BlockSpec((1, th), lambda i, k: (0, k)),    # b1 H-chunk
                pl.BlockSpec((th, Ep), lambda i, k: (k, 0)),   # W2 H-chunk
                pl.BlockSpec((1, Ep), lambda i, k: (0, 0)),    # b2
            ],
            out_specs=pl.BlockSpec((tm, Ep), lambda i, k: (i, 0)),
            scratch_shapes=[pltpu.VMEM((tm, Ep), jnp.float32)],
        ),
        compiler_params=pltpu.CompilerParams(
            dimension_semantics=("parallel", "arbitrary"),
            vmem_limit_bytes=48 * 1024 * 1024,
        ),
        cost_estimate=cost,
    )(x2, w1p, b1p, w2p, b2p)

    return out[:M, :E].reshape(B, S, E)


def _init_linear(key, fan_in, fan_out, dtype=jnp.float32):
    # Deterministic init mimicking torch.nn.Linear (uniform ±1/sqrt(fan_in)).
    kw, kb = jax.random.split(key)
    bound = 1.0 / jnp.sqrt(fan_in)
    w = jax.random.uniform(kw, (fan_in, fan_out), dtype, -bound, bound)
    b = jax.random.uniform(kb, (fan_out,), dtype, -bound, bound)
    return w, b


if __name__ == "__main__":
    key = jax.random.PRNGKey(0)
    k_x, k_fc1, k_fc2 = jax.random.split(key, 3)

    # Small shapes consistent with the module.
    B, S = 2, 8
    emb_size = 32
    d_inner_hid = 64

    x = jax.random.normal(k_x, (B, S, emb_size), jnp.float32)
    w1, b1 = _init_linear(k_fc1, emb_size, d_inner_hid)
    w2, b2 = _init_linear(k_fc2, d_inner_hid, emb_size)

    out = gran_ffn(x, w1, b1, w2, b2)
    jax.block_until_ready(out)

    # Reference mirroring kernel numerics (bf16 matmul operands, f32 accumulate).
    xb = x.reshape(-1, emb_size).astype(jnp.bfloat16)
    h_ref = jnp.dot(xb, w1.astype(jnp.bfloat16),
                    preferred_element_type=jnp.float32) + b1
    h_ref = jax.nn.gelu(h_ref)
    ref = (jnp.dot(h_ref.astype(jnp.bfloat16), w2.astype(jnp.bfloat16),
                   preferred_element_type=jnp.float32) + b2).reshape(B, S, emb_size)

    assert out.shape == (B, S, emb_size)
    assert jnp.allclose(out, ref, atol=5e-2, rtol=5e-2), "mismatch vs reference"

    print("KERNEL_OK")
</pallas_src>

<mosaic_0001>
module attributes {stable_mosaic.version = 11 : i64} {
  func.func @_ffn_kernel(%arg0: i32, %arg1: i32, %arg2: memref<16x128xbf16, #tpu.memory_space<vmem>>, %arg3: memref<128x128xbf16, #tpu.memory_space<vmem>>, %arg4: memref<1x128xf32, #tpu.memory_space<vmem>>, %arg5: memref<128x128xbf16, #tpu.memory_space<vmem>>, %arg6: memref<1x128xf32, #tpu.memory_space<vmem>>, %arg7: memref<16x128xf32, #tpu.memory_space<vmem>>, %arg8: memref<16x128xf32, #tpu.memory_space<vmem>>) attributes {dimension_semantics = [#tpu.dimension_semantics<parallel>, #tpu.dimension_semantics<arbitrary>], iteration_bounds = array<i64: 1, 1>, scalar_prefetch = 0 : i64, scratch_operands = 1 : i64, tpu.core_type = #tpu.core_type<tc>, window_params = [{transform_indices = @transform_0, window_bounds = array<i64: 16, 128>}, {transform_indices = @transform_1, window_bounds = array<i64: 128, 128>}, {transform_indices = @transform_2, window_bounds = array<i64: 1, 128>}, {transform_indices = @transform_3, window_bounds = array<i64: 128, 128>}, {pipeline_mode = #tpu.pipeline_mode<synchronous>, transform_indices = @transform_4, window_bounds = array<i64: 1, 128>}, {transform_indices = @transform_5, window_bounds = array<i64: 16, 128>}]} {
    %c0_i32 = arith.constant 0 : i32
    %0 = arith.cmpi eq, %arg1, %c0_i32 : i32
    %1 = arith.extui %0 : i1 to i32
    %c0_i32_0 = arith.constant 0 : i32
    %2 = arith.cmpi ne, %1, %c0_i32_0 : i32
    scf.if %2 {
      %cst_19 = arith.constant 0.000000e+00 : f32
      %31 = vector.broadcast %cst_19 : f32 to vector<16x128xf32>
      %c0_20 = arith.constant 0 : index
      %c0_21 = arith.constant 0 : index
      %32 = vector.load %arg8[%c0_20, %c0_21] : memref<16x128xf32, #tpu.memory_space<vmem>>, vector<16x128xf32>
      tpu.vector_store %arg8[%c0_20, %c0_21], %31 {strides = array<i32>} : memref<16x128xf32, #tpu.memory_space<vmem>>, vector<16x128xf32>,
    } else {
    }
    %c0 = arith.constant 0 : index
    %c0_1 = arith.constant 0 : index
    %3 = vector.load %arg2[%c0, %c0_1] : memref<16x128xbf16, #tpu.memory_space<vmem>>, vector<16x128xbf16>
    %c0_2 = arith.constant 0 : index
    %c0_3 = arith.constant 0 : index
    %4 = vector.load %arg3[%c0_2, %c0_3] : memref<128x128xbf16, #tpu.memory_space<vmem>>, vector<128x128xbf16>
    %cst = arith.constant dense<0.000000e+00> : vector<16x128xf32>
    %5 = tpu.matmul %3, %4, %cst {dimension_numbers = #tpu.dot_dimension_numbers<[1], [0], [0], [1], [0, 0, 1, 1], [], []>} : vector<16x128xbf16>, vector<128x128xbf16>, vector<16x128xf32> -> vector<16x128xf32>
    %c0_4 = arith.constant 0 : index
    %c0_5 = arith.constant 0 : index
    %6 = vector.load %arg4[%c0_4, %c0_5] : memref<1x128xf32, #tpu.memory_space<vmem>>, vector<1x128xf32>
    %7 = vector.broadcast %6 : vector<1x128xf32> to vector<16x128xf32>
    %8 = arith.addf %5, %7 : vector<16x128xf32>
    %9 = arith.mulf %8, %8 : vector<16x128xf32>
    %10 = arith.mulf %8, %9 : vector<16x128xf32>
    %cst_6 = arith.constant 4.471500e-02 : f32
    %11 = vector.broadcast %cst_6 : f32 to vector<16x128xf32>
    %12 = arith.mulf %11, %10 : vector<16x128xf32>
    %13 = arith.addf %8, %12 : vector<16x128xf32>
    %cst_7 = arith.constant 0.797884583 : f32
    %14 = vector.broadcast %cst_7 : f32 to vector<16x128xf32>
    %15 = arith.mulf %14, %13 : vector<16x128xf32>
    %16 = math.tanh %15 : vector<16x128xf32>
    %cst_8 = arith.constant 1.000000e+00 : f32
    %17 = vector.broadcast %cst_8 : f32 to vector<16x128xf32>
    %18 = arith.addf %17, %16 : vector<16x128xf32>
    %cst_9 = arith.constant 5.000000e-01 : f32
    %19 = vector.broadcast %cst_9 : f32 to vector<16x128xf32>
    %20 = arith.mulf %19, %18 : vector<16x128xf32>
    %21 = arith.mulf %8, %20 : vector<16x128xf32>
    %c0_10 = arith.constant 0 : index
    %c0_11 = arith.constant 0 : index
    %22 = vector.load %arg8[%c0_10, %c0_11] : memref<16x128xf32, #tpu.memory_space<vmem>>, vector<16x128xf32>
    %23 = arith.truncf %21 : vector<16x128xf32> to vector<16x128xbf16>
    %c0_12 = arith.constant 0 : index
    %c0_13 = arith.constant 0 : index
    %24 = vector.load %arg5[%c0_12, %c0_13] : memref<128x128xbf16, #tpu.memory_space<vmem>>, vector<128x128xbf16>
    %cst_14 = arith.constant dense<0.000000e+00> : vector<16x128xf32>
    %25 = tpu.matmul %23, %24, %cst_14 {dimension_numbers = #tpu.dot_dimension_numbers<[1], [0], [0], [1], [0, 0, 1, 1], [], []>} : vector<16x128xbf16>, vector<128x128xbf16>, vector<16x128xf32> -> vector<16x128xf32>
    %26 = arith.addf %22, %25 : vector<16x128xf32>
    %c0_15 = arith.constant 0 : index
    %c0_16 = arith.constant 0 : index
    %27 = vector.load %arg8[%c0_15, %c0_16] : memref<16x128xf32, #tpu.memory_space<vmem>>, vector<16x128xf32>
    tpu.vector_store %arg8[%c0_15, %c0_16], %26 {strides = array<i32>} : memref<16x128xf32, #tpu.memory_space<vmem>>, vector<16x128xf32>,
    %c0_i32_17 = arith.constant 0 : i32
    %28 = arith.cmpi eq, %arg1, %c0_i32_17 : i32
    %29 = arith.extui %28 : i1 to i32
    %c0_i32_18 = arith.constant 0 : i32
    %30 = arith.cmpi ne, %29, %c0_i32_18 : i32
    scf.if %30 {
      %c0_19 = arith.constant 0 : index
      %c0_20 = arith.constant 0 : index
      %31 = vector.load %arg8[%c0_19, %c0_20] : memref<16x128xf32, #tpu.memory_space<vmem>>, vector<16x128xf32>
      %c0_21 = arith.constant 0 : index
      %c0_22 = arith.constant 0 : index
      %32 = vector.load %arg6[%c0_21, %c0_22] : memref<1x128xf32, #tpu.memory_space<vmem>>, vector<1x128xf32>
      %33 = vector.broadcast %32 : vector<1x128xf32> to vector<16x128xf32>
      %34 = arith.addf %31, %33 : vector<16x128xf32>
      %c0_23 = arith.constant 0 : index
      %c0_24 = arith.constant 0 : index
      %35 = vector.load %arg7[%c0_23, %c0_24] : memref<16x128xf32, #tpu.memory_space<vmem>>, vector<16x128xf32>
      tpu.vector_store %arg7[%c0_23, %c0_24], %34 {strides = array<i32>} : memref<16x128xf32, #tpu.memory_space<vmem>>, vector<16x128xf32>,
    } else {
    }
    return
  }
  func.func @transform_0(%arg0: i32, %arg1: i32) -> (i32, i32) {
    %c0_i32 = arith.constant 0 : i32
    %c0_i32_0 = arith.constant 0 : i32
    return %arg0, %c0_i32 : i32, i32
  }
  func.func @transform_1(%arg0: i32, %arg1: i32) -> (i32, i32) {
    %c0_i32 = arith.constant 0 : i32
    %c0_i32_0 = arith.constant 0 : i32
    return %c0_i32, %arg1 : i32, i32
  }
  func.func @transform_2(%arg0: i32, %arg1: i32) -> (i32, i32) {
    %c0_i32 = arith.constant 0 : i32
    %c0_i32_0 = arith.constant 0 : i32
    return %c0_i32, %arg1 : i32, i32
  }
  func.func @transform_3(%arg0: i32, %arg1: i32) -> (i32, i32) {
    %c0_i32 = arith.constant 0 : i32
    %c0_i32_0 = arith.constant 0 : i32
    return %arg1, %c0_i32 : i32, i32
  }
  func.func @transform_4(%arg0: i32, %arg1: i32) -> (i32, i32) {
    %c0_i32 = arith.constant 0 : i32
    %c0_i32_0 = arith.constant 0 : i32
    %c0_i32_1 = arith.constant 0 : i32
    return %c0_i32, %c0_i32_0 : i32, i32
  }
  func.func @transform_5(%arg0: i32, %arg1: i32) -> (i32, i32) {
    %c0_i32 = arith.constant 0 : i32
    %c0_i32_0 = arith.constant 0 : i32
    return %arg0, %c0_i32 : i32, i32
  }
}

</mosaic_0001>

<llo_original>
// kernel: gran_ffn.1
$region0: #{gran_ffn.1}
  #allocation0 [shape = 'u32[]', space=smem, size = 0x4, offset = 0x4, fixed_abs, tag = 'smem constant byte address 0x4 - core index']
  #allocation1 [shape = 'u32[144,128]{1,0:T(1,128)}', space=vmem, size = 0x12000, scoped, tag = 'internal scratch']
  #allocation2 [shape = 'f32[16,128]{1,0:T(8,128)}', space=vmem, size = 0x2000, scoped, tag = 'scratch operand']
  %s0 = inlined_call_operand.vmem [shape: bf16[16,128], index: 0, kind: input, shape index: {}]
  %s1 = inlined_call_operand.vmem [shape: bf16[128,128], index: 1, kind: input, shape index: {}]
  %s2 = inlined_call_operand.vmem [shape: f32[1,128], index: 2, kind: input, shape index: {}]
  %s3 = inlined_call_operand.vmem [shape: bf16[128,128], index: 3, kind: input, shape index: {}]
  %s4 = inlined_call_operand.vmem [shape: f32[1,128], index: 4, kind: input, shape index: {}]
  %s5 = inlined_call_operand.vmem [shape: f32[16,128], index: 5, kind: output, shape index: {}]
  %s6 = sld [smem:[#allocation0]]
  $region38: #{gran_ffn.1} parent=0
    _
  %s8 = ssub.s32 1, %s6
  %s9 = scalar_select 0, %s8, %s6
  // Predicated region
  $region2: #{gran_ffn.1} parent=0 // pred_check
    _
  $region3: #{gran_ffn.1} parent=0 // pred_check_branch
    %11 = sbr.rel (0) target = $region5
  $region4: #{gran_ffn.1} parent=0 // pred_region
    _
  $region5: #{gran_ffn.1} parent=0 // pred_fallthru
    _
  // Predicated region
  $region6: #{gran_ffn.1} parent=0 // pred_check
    _
  $region7: #{gran_ffn.1} parent=0 // pred_check_branch
    %13 = sbr.rel (0) target = $region9
  $region8: #{gran_ffn.1} parent=0 // pred_region
    _
  $region9: #{gran_ffn.1} parent=0 // pred_fallthru
    _
  // Predicated region
  $region10: #{gran_ffn.1} parent=0 // pred_check
    _
  $region11: #{gran_ffn.1} parent=0 // pred_check_branch
    %15 = sbr.rel (0) target = $region13
  $region12: #{gran_ffn.1} parent=0 // pred_region
    _
  $region13: #{gran_ffn.1} parent=0 // pred_fallthru
    _
  // Predicated region
  $region14: #{gran_ffn.1} parent=0 // pred_check
    _
  $region15: #{gran_ffn.1} parent=0 // pred_check_branch
    %17 = sbr.rel (0) target = $region17
  $region16: #{gran_ffn.1} parent=0 // pred_region
    _
  $region17: #{gran_ffn.1} parent=0 // pred_fallthru
    _
  // Predicated region
  $region18: #{gran_ffn.1} parent=0 // pred_check
    _
  $region19: #{gran_ffn.1} parent=0 // pred_check_branch
    %19 = sbr.rel (0) target = $region21
  $region20: #{gran_ffn.1} parent=0 // pred_region
    _
  $region21: #{gran_ffn.1} parent=0 // pred_fallthru
    _
  %p21 = scmp.eq.s32.totalorder 0, 0
  // Predicated region
  $region22: #{gran_ffn.1} parent=0 // pred_check
    %p22 = pneg %p21
  $region23: #{gran_ffn.1} parent=0 // pred_check_branch
    %24 = sbr.rel (%p22) target = $region25
  $region24: #{gran_ffn.1} parent=0 // pred_region
    %25 = vst [vmem:[#allocation2] sm:$0xff] 0.0
    %26 = vst [vmem:[#allocation2 + $0x8] sm:$0xff] 0.0
  $region25: #{gran_ffn.1} parent=0 // pred_fallthru
    _
  %v27 = vld [vmem:[%s0] sm:$0xf]
  %v28 = vld [vmem:[%s0 + $0x4] sm:$0xf]
  %v29 = vld [vmem:[%s1] sm:$0xf]
  %v30 = vld [vmem:[%s1 + $0x4] sm:$0xf]
  %v31 = vld [vmem:[%s1 + $0x8] sm:$0xf]
  %v32 = vld [vmem:[%s1 + $0xc] sm:$0xf]
  %v33 = vld [vmem:[%s1 + $0x10] sm:$0xf]
  %v34 = vld [vmem:[%s1 + $0x14] sm:$0xf]
  %v35 = vld [vmem:[%s1 + $0x18] sm:$0xf]
  %v36 = vld [vmem:[%s1 + $0x1c] sm:$0xf]
  %v37 = vld [vmem:[%s1 + $0x20] sm:$0xf]
  %v38 = vld [vmem:[%s1 + $0x24] sm:$0xf]
  %v39 = vld [vmem:[%s1 + $0x28] sm:$0xf]
  %v40 = vld [vmem:[%s1 + $0x2c] sm:$0xf]
  %v41 = vld [vmem:[%s1 + $0x30] sm:$0xf]
  %v42 = vld [vmem:[%s1 + $0x34] sm:$0xf]
  %v43 = vld [vmem:[%s1 + $0x38] sm:$0xf]
  %v44 = vld [vmem:[%s1 + $0x3c] sm:$0xf]
  %v45 = vld [vmem:[%s2] sm:$0x1]
  %v47 = vlaneseq
  %v48 = vshrl.u32 %v47, 7
  %v49 = vsub.s32 0, %v48
  %v50 = vrot.slane %v45, %v49
  %v54 = vunpack.c.l.b16 %v27
  %v55 = vunpack.c.l.b16 %v28
  %v56 = vpack.c.b16 %v55, %v54
  %v74 = vunpack.c.l.b16 %v29
  %v75 = vunpack.c.l.b16 %v30
  %v76 = vunpack.c.l.b16 %v31
  %v77 = vunpack.c.l.b16 %v32
  %v78 = vunpack.c.l.b16 %v33
  %v79 = vunpack.c.l.b16 %v34
  %v80 = vunpack.c.l.b16 %v35
  %v81 = vunpack.c.l.b16 %v36
  %v82 = vunpack.c.l.b16 %v37
  %v83 = vunpack.c.l.b16 %v38
  %v84 = vunpack.c.l.b16 %v39
  %v85 = vunpack.c.l.b16 %v40
  %v86 = vunpack.c.l.b16 %v41
  %v87 = vunpack.c.l.b16 %v42
  %v88 = vunpack.c.l.b16 %v43
  %v89 = vunpack.c.l.b16 %v44
  %v90 = vpack.c.b16 %v75, %v74
  %v91 = vpack.c.b16 %v77, %v76
  %v92 = vpack.c.b16 %v79, %v78
  %v93 = vpack.c.b16 %v81, %v80
  %v94 = vpack.c.b16 %v83, %v82
  %v95 = vpack.c.b16 %v85, %v84
  %v96 = vpack.c.b16 %v87, %v86
  %v97 = vpack.c.b16 %v89, %v88
  %106 = vmatprep.subr.bf16.mxu0 0
  %107 = vmatpush1.bf16.msra.mxu0 %v90
  %108 = vmatprep.subr.bf16.mxu0 0
  %109 = vmatpush1.bf16.msra.mxu0 %v91
  %110 = vmatprep.subr.bf16.mxu0 0
  %111 = vmatpush1.bf16.msra.mxu0 %v92
  %112 = vmatprep.subr.bf16.mxu0 0
  %113 = vmatpush1.bf16.msra.mxu0 %v93
  %114 = vmatprep.subr.bf16.mxu0 0
  %115 = vmatpush1.bf16.msra.mxu0 %v94
  %116 = vmatprep.subr.bf16.mxu0 0
  %117 = vmatpush1.bf16.msra.mxu0 %v95
  %118 = vmatprep.subr.bf16.mxu0 0
  %119 = vmatpush1.bf16.msra.mxu0 %v96
  %120 = vmatprep.subr.bf16.mxu0 0
  %121 = vmatpush1.bf16.msra.mxu0 %v97
  %122 = vmatprep.subr.bf16.mxu0 0
  %123 = vmatpush1.bf16.msra.mxu0 0
  %124 = vmatprep.subr.bf16.mxu0 0
  %125 = vmatpush1.bf16.msra.mxu0 0
  %126 = vmatprep.subr.bf16.mxu0 0
  %127 = vmatpush1.bf16.msra.mxu0 0
  %128 = vmatprep.subr.bf16.mxu0 0
  %129 = vmatpush1.bf16.msra.mxu0 0
  %130 = vmatprep.subr.bf16.mxu0 0
  %131 = vmatpush1.bf16.msra.mxu0 0
  %132 = vmatprep.subr.bf16.mxu0 0
  %133 = vmatpush1.bf16.msra.mxu0 0
  %134 = vmatprep.subr.bf16.mxu0 0
  %135 = vmatpush1.bf16.msra.mxu0 0
  %136 = vmatprep.subr.bf16.mxu0 0
  %137 = vmatpush1.bf16.msra.mxu0 0
  %138 = vmatprep.mubr.bf16.mxu0 0
  %139 = vmatmul.mubr.bf16.gmra.mrb[0].mxu0 %v56
  %v140 = vpop.f32.mrb[0].mxu0
  %v141 = vadd.f32 %v50, %v140
  %v142 = vpop.f32.mrb[0].mxu0
  %v143 = vpop.f32.mrb[0].mxu0
  %v144 = vadd.f32 %v50, %v143
  %v145 = vpop.f32.mrb[0].mxu0
  %146 = vdwg.mxu0
  %v147 = vmul.f32 %v141, %v141
  %v148 = vmul.f32 %v144, %v144
  %v149 = vmul.f32 %v141, %v147
  %v150 = vmul.f32 %v144, %v148
  %v151 = vmul.f32 %v149, 0.044715
  %v152 = vmul.f32 %v150, 0.044715
  %v153 = vadd.f32 %v141, %v151
  %v154 = vadd.f32 %v144, %v152
  %v155 = vmul.f32 %v153, 0.7978846
  %v156 = vmul.f32 %v154, 0.7978846
  %v157 = vtanh.pop %v155
  %v158 = vtanh.pop %v156
  %v159 = vadd.f32 %v157, 1.0
  %v160 = vadd.f32 %v158, 1.0
  %v161 = vmul.f32 %v159, 0.5
  %v162 = vmul.f32 %v160, 0.5
  %v163 = vmul.f32 %v141, %v161
  %v164 = vmul.f32 %v144, %v162
  %v165 = vld [vmem:[#allocation2] sm:$0xff]
  %v166 = vld [vmem:[#allocation2 + $0x8] sm:$0xff]
  %v167 = vpack.c.bf16 %v164, %v163
  %v168 = vld [vmem:[%s3] sm:$0xf]
  %v169 = vld [vmem:[%s3 + $0x4] sm:$0xf]
  %v170 = vld [vmem:[%s3 + $0x8] sm:$0xf]
  %v171 = vld [vmem:[%s3 + $0xc] sm:$0xf]
  %v172 = vld [vmem:[%s3 + $0x10] sm:$0xf]
  %v173 = vld [vmem:[%s3 + $0x14] sm:$0xf]
  %v174 = vld [vmem:[%s3 + $0x18] sm:$0xf]
  %v175 = vld [vmem:[%s3 + $0x1c] sm:$0xf]
  %v176 = vld [vmem:[%s3 + $0x20] sm:$0xf]
  %v177 = vld [vmem:[%s3 + $0x24] sm:$0xf]
  %v178 = vld [vmem:[%s3 + $0x28] sm:$0xf]
  %v179 = vld [vmem:[%s3 + $0x2c] sm:$0xf]
  %v180 = vld [vmem:[%s3 + $0x30] sm:$0xf]
  %v181 = vld [vmem:[%s3 + $0x34] sm:$0xf]
  %v182 = vld [vmem:[%s3 + $0x38] sm:$0xf]
  %v183 = vld [vmem:[%s3 + $0x3c] sm:$0xf]
  %v200 = vunpack.c.l.b16 %v168
  %v201 = vunpack.c.l.b16 %v169
  %v202 = vunpack.c.l.b16 %v170
  %v203 = vunpack.c.l.b16 %v171
  %v204 = vunpack.c.l.b16 %v172
  %v205 = vunpack.c.l.b16 %v173
  %v206 = vunpack.c.l.b16 %v174
  %v207 = vunpack.c.l.b16 %v175
  %v208 = vunpack.c.l.b16 %v176
  %v209 = vunpack.c.l.b16 %v177
  %v210 = vunpack.c.l.b16 %v178
  %v211 = vunpack.c.l.b16 %v179
  %v212 = vunpack.c.l.b16 %v180
  %v213 = vunpack.c.l.b16 %v181
  %v214 = vunpack.c.l.b16 %v182
  %v215 = vunpack.c.l.b16 %v183
  %v216 = vpack.c.b16 %v201, %v200
  %v217 = vpack.c.b16 %v203, %v202
  %v218 = vpack.c.b16 %v205, %v204
  %v219 = vpack.c.b16 %v207, %v206
  %v220 = vpack.c.b16 %v209, %v208
  %v221 = vpack.c.b16 %v211, %v210
  %v222 = vpack.c.b16 %v213, %v212
  %v223 = vpack.c.b16 %v215, %v214
  %232 = vmatprep.subr.bf16.mxu0 0
  %233 = vmatpush1.bf16.msra.mxu0 %v216
  %234 = vmatprep.subr.bf16.mxu0 0
  %235 = vmatpush1.bf16.msra.mxu0 %v217
  %236 = vmatprep.subr.bf16.mxu0 0
  %237 = vmatpush1.bf16.msra.mxu0 %v218
  %238 = vmatprep.subr.bf16.mxu0 0
  %239 = vmatpush1.bf16.msra.mxu0 %v219
  %240 = vmatprep.subr.bf16.mxu0 0
  %241 = vmatpush1.bf16.msra.mxu0 %v220
  %242 = vmatprep.subr.bf16.mxu0 0
  %243 = vmatpush1.bf16.msra.mxu0 %v221
  %244 = vmatprep.subr.bf16.mxu0 0
  %245 = vmatpush1.bf16.msra.mxu0 %v222
  %246 = vmatprep.subr.bf16.mxu0 0
  %247 = vmatpush1.bf16.msra.mxu0 %v223
  %248 = vmatprep.subr.bf16.mxu0 0
  %249 = vmatpush1.bf16.msra.mxu0 0
  %250 = vmatprep.subr.bf16.mxu0 0
  %251 = vmatpush1.bf16.msra.mxu0 0
  %252 = vmatprep.subr.bf16.mxu0 0
  %253 = vmatpush1.bf16.msra.mxu0 0
  %254 = vmatprep.subr.bf16.mxu0 0
  %255 = vmatpush1.bf16.msra.mxu0 0
  %256 = vmatprep.subr.bf16.mxu0 0
  %257 = vmatpush1.bf16.msra.mxu0 0
  %258 = vmatprep.subr.bf16.mxu0 0
  %259 = vmatpush1.bf16.msra.mxu0 0
  %260 = vmatprep.subr.bf16.mxu0 0
  %261 = vmatpush1.bf16.msra.mxu0 0
  %262 = vmatprep.subr.bf16.mxu0 0
  %263 = vmatpush1.bf16.msra.mxu0 0
  %264 = vmatprep.mubr.bf16.mxu0 0
  %265 = vmatmul.mubr.bf16.gmra.mrb[0].mxu0 %v167
  %v266 = vpop.f32.mrb[0].mxu0
  %v267 = vadd.f32 0.0, %v266
  %v268 = vpop.f32.mrb[0].mxu0
  %v269 = vpop.f32.mrb[0].mxu0
  %v270 = vadd.f32 0.0, %v269
  %v271 = vpop.f32.mrb[0].mxu0
  %272 = vdwg.mxu0
  %v273 = vadd.f32 %v165, %v267
  %v274 = vadd.f32 %v166, %v270
  %275 = vst [vmem:[#allocation2] sm:$0xff] %v273
  %276 = vst [vmem:[#allocation2 + $0x8] sm:$0xff] %v274
  // Predicated region
  $region26: #{gran_ffn.1} parent=0 // pred_check
    %p277 = pneg %p21
  $region27: #{gran_ffn.1} parent=0 // pred_check_branch
    %279 = sbr.rel (%p277) target = $region29
  $region28: #{gran_ffn.1} parent=0 // pred_region
    %v280 = vld [vmem:[#allocation2] sm:$0xff]
    %v281 = vld [vmem:[#allocation2 + $0x8] sm:$0xff]
    %v282 = vld [vmem:[%s4] sm:$0x1]
    %v284 = vlaneseq
    %v285 = vshrl.u32 %v284, 7
    %v286 = vsub.s32 0, %v285
    %v287 = vrot.slane %v282, %v286
    %v289 = vadd.f32 %v280, %v287
    %v290 = vadd.f32 %v281, %v287
    %291 = vst [vmem:[%s5] sm:$0xff] %v289
    %292 = vst [vmem:[%s5 + $0x8] sm:$0xff] %v290
  $region29: #{gran_ffn.1} parent=0 // pred_fallthru
    _
  // Predicated region
  $region30: #{gran_ffn.1} parent=0 // pred_check
    _
  $region31: #{gran_ffn.1} parent=0 // pred_check_branch
    %294 = sbr.rel (0) target = $region33
  $region32: #{gran_ffn.1} parent=0 // pred_region
    _
  $region33: #{gran_ffn.1} parent=0 // pred_fallthru
    _
  // Predicated region
  $region34: #{gran_ffn.1} parent=0 // pred_check
    _
  $region35: #{gran_ffn.1} parent=0 // pred_check_branch
    %296 = sbr.rel (0) target = $region37
  $region36: #{gran_ffn.1} parent=0 // pred_region
    _
  $region37: #{gran_ffn.1} parent=0 // pred_fallthru
    _

</llo_original>
